<compile_context>
chip_gen: v5e
topology: v5e:2x2
jax: 0.10.0
libtpu: 0.0.40
codegen_flags: <defaults>
</compile_context>

<pallas_src>
import functools

import jax
import jax.numpy as jnp
from jax.experimental import pallas as pl
from jax.experimental.pallas import tpu as pltpu

_NEG_LOGIT = -1e9     # class-axis padding (vanishes in log-sum-exp)
_NEG_POINT = -1e4     # point/row padding (sigmoid & bce underflow to exactly 0, also in bf16)


def _round_up(n, m):
    return -(-n // m) * m


# ----------------------------------------------------------------------------
# Fused Pallas kernel: all four SetCriterion loss reductions, gridded over M.
# ----------------------------------------------------------------------------
def _fused_loss_kernel(ce_logits_ref, ce_tgt_ref, ce_w_ref, ce_seg_ref,
                       pt_logits_ref, pt_labels_ref, out_ref, *, n_img):
    """Per grid step: partial BCE/dice sums over one M-tile of sampled points; CE on tile 0 only.

    Output row lanes: 0 = bce partial sum, 1 = dice partial sum,
                      2 = loss_ce_ins (tile 0), 3 = loss_ce_id (tile 0)."""
    lane = jax.lax.broadcasted_iota(jnp.int32, (1, 128), 1)

    # ---- point losses: sigmoid BCE-with-logits + dice, partial sums over this M tile ----
    x = pt_logits_ref[...].astype(jnp.float32)     # bf16 stream -> f32 compute (v5e-safe)
    t = pt_labels_ref[...].astype(jnp.float32)
    e = jnp.exp(-jnp.abs(x))                       # ONE exp shared by log1p() and sigmoid()
    bce = jnp.maximum(x, 0.0) - x * t + jnp.log1p(e)            # padded entries contribute 0
    bce_11 = jnp.sum(jnp.sum(bce, axis=1, keepdims=True), axis=0, keepdims=True)
    p = jnp.where(x >= 0.0, 1.0, e) / (1.0 + e)                 # exact sigmoid, no extra exp
    numer = 2.0 * jnp.sum(p * t, axis=1, keepdims=True)         # [tile_m, 1]
    denom = jnp.sum(p, axis=1, keepdims=True) + jnp.sum(t, axis=1, keepdims=True)
    dice = 1.0 - (numer + 1.0) / (denom + 1.0)                  # padded rows -> exactly 0
    dice_11 = jnp.sum(dice, axis=0, keepdims=True)
    out_ref[...] = (jnp.where(lane == 0, bce_11, 0.0)
                    + jnp.where(lane == 1, dice_11, 0.0))

    # ---- CE losses (small, resident, class axis on 8 sublanes): evaluated on tile 0 only ----
    @pl.when(pl.program_id(0) == 0)
    def _():
        xl = ce_logits_ref[...]                                 # [Cpad(=8), Rpad]
        m = jnp.max(xl, axis=0, keepdims=True)
        lse = jnp.log(jnp.sum(jnp.exp(xl - m), axis=0, keepdims=True)) + m
        cls = jax.lax.broadcasted_iota(jnp.int32, xl.shape, 0)
        x_t = jnp.sum(jnp.where(cls == ce_tgt_ref[...], xl, 0.0), axis=0, keepdims=True)
        w = ce_w_ref[...]                                       # [1, Rpad]
        nllw = (lse - x_t) * w                                  # weighted NLL per row
        seg = ce_seg_ref[...]                                   # [8, Rpad]; rows 0..B-1 = ins imgs, row B = id
        num = jnp.sum(seg * nllw, axis=1, keepdims=True)        # [8, 1]  (lane-axis reduce)
        den = jnp.sum(seg * w, axis=1, keepdims=True)
        # NOTE: torch cross_entropy would produce NaN for an image with zero total weight;
        # here such an image contributes 0 (documented semantic divergence).
        ratio = num / jnp.maximum(den, 1e-12)
        row = jax.lax.broadcasted_iota(jnp.int32, ratio.shape, 0)
        ce_ins_11 = jnp.sum(jnp.where(row < n_img, ratio, 0.0),
                            axis=0, keepdims=True) * (1.0 / n_img)
        ce_id_11 = jnp.sum(jnp.where(row == n_img, ratio, 0.0), axis=0, keepdims=True)
        out_ref[...] = (out_ref[...]
                        + jnp.where(lane == 2, ce_ins_11, 0.0)
                        + jnp.where(lane == 3, ce_id_11, 0.0))


def fused_set_criterion_losses(ce_logits_t, ce_tgt, ce_w, ce_seg, pt_logits, pt_labels,
                               *, n_img, tile_m, num_points, num_masks):
    """One gridded pallas_call producing (loss_ce_ins, loss_ce_id, loss_mask, loss_dice)."""
    Cpad, Rpad = ce_logits_t.shape
    Mpad, Ppad = pt_logits.shape
    n_tiles = Mpad // tile_m

    kernel = functools.partial(_fused_loss_kernel, n_img=n_img)

    grid_spec = pltpu.PrefetchScalarGridSpec(
        num_scalar_prefetch=0,
        grid=(n_tiles,),
        in_specs=[
            pl.BlockSpec(ce_logits_t.shape, lambda i: (0, 0)),   # resident across the grid
            pl.BlockSpec(ce_tgt.shape, lambda i: (0, 0)),
            pl.BlockSpec(ce_w.shape, lambda i: (0, 0)),
            pl.BlockSpec(ce_seg.shape, lambda i: (0, 0)),
            pl.BlockSpec((tile_m, Ppad), lambda i: (i, 0)),      # streamed + double-buffered
            pl.BlockSpec((tile_m, Ppad), lambda i: (i, 0)),
        ],
        out_specs=pl.BlockSpec((1, 128), lambda i: (i, 0)),
    )

    ce_bytes = 4 * Rpad * (Cpad + 1 + 1 + ce_seg.shape[0])
    pt_bytes = 2 * 2 * 2 * tile_m * Ppad                          # 2 arrays x double-buffer x bf16
    vmem_limit = int(min(max(2 * (ce_bytes + pt_bytes) + (2 << 20), 16 << 20), 64 << 20))

    cost = pl.CostEstimate(
        flops=int(14 * Mpad * Ppad + 12 * Cpad * Rpad),
        transcendentals=int(2 * Mpad * Ppad + Cpad * Rpad),
        bytes_accessed=int(2 * 2 * Mpad * Ppad + 4 * Rpad * (Cpad + 10) + 4 * n_tiles * 128),
    )

    out = pl.pallas_call(
        kernel,
        grid_spec=grid_spec,
        out_shape=jax.ShapeDtypeStruct((n_tiles, 128), jnp.float32),
        compiler_params=pltpu.CompilerParams(
            dimension_semantics=("parallel",),                    # v7x: two TCs split the M tiles
            vmem_limit_bytes=vmem_limit),
        cost_estimate=cost,
    )(ce_logits_t, ce_tgt, ce_w, ce_seg, pt_logits, pt_labels)

    inv_nm = 1.0 / (num_masks + 1e-8)                             # exact (no approx reciprocal)
    loss_ce_ins = out[0, 2]
    loss_ce_id = out[0, 3]
    loss_mask = jnp.sum(out[:, 0]) * (inv_nm / float(num_points))
    loss_dice = jnp.sum(out[:, 1]) * inv_nm
    return loss_ce_ins, loss_ce_id, loss_mask, loss_dice


# ----------------------------------------------------------------------------
# JAX glue: point sampling utilities (grid_sample equivalent, gather formulation)
# ----------------------------------------------------------------------------
def calculate_uncertainty(logits):
    # logits: [R, 1, ...]
    return -jnp.abs(logits)


def point_sample(inp, coords):
    """detectron2 point_sample(input, coords, align_corners=False) via 4-corner gathers.

    inp: [N, C, H, W], coords: [N, P, 2] in [0, 1] as (x, y). Returns [N, C, P].
    Each mask is read ~once (HBM floor) instead of materializing an [N, P, H*W] one-hot."""
    N, C, H, W = inp.shape
    x = coords[..., 0] * W - 0.5                                  # [N, P]
    y = coords[..., 1] * H - 0.5
    x0 = jnp.floor(x)
    y0 = jnp.floor(y)
    wx1 = x - x0
    wx0 = 1.0 - wx1
    wy1 = y - y0
    wy0 = 1.0 - wy1
    flat = inp.reshape(N, C, H * W).astype(jnp.float32)

    def corner(ix, iy, w):
        valid = ((ix >= 0) & (ix <= W - 1) & (iy >= 0) & (iy <= H - 1)).astype(jnp.float32)
        ixc = jnp.clip(ix, 0, W - 1).astype(jnp.int32)
        iyc = jnp.clip(iy, 0, H - 1).astype(jnp.int32)
        idx = iyc * W + ixc                                       # [N, P]
        g = jnp.take_along_axis(flat, idx[:, None, :], axis=2)    # [N, C, P] gather
        return g * (w * valid)[:, None, :]

    out = (corner(x0, y0, wx0 * wy0) + corner(x0 + 1.0, y0, wx1 * wy0)
           + corner(x0, y0 + 1.0, wx0 * wy1) + corner(x0 + 1.0, y0 + 1.0, wx1 * wy1))
    return out.astype(inp.dtype)


def get_uncertain_point_coords_with_randomness(coarse_logits, uncertainty_func, num_points,
                                               oversample_ratio, importance_sample_ratio, key):
    N = coarse_logits.shape[0]
    num_sampled = int(num_points * oversample_ratio)
    k1, k2 = jax.random.split(key)
    point_coords = jax.random.uniform(k1, (N, num_sampled, 2), dtype=jnp.float32)
    point_logits = point_sample(coarse_logits, point_coords)                  # [N, 1, S]
    point_uncertainties = uncertainty_func(point_logits)
    num_uncertain_points = int(importance_sample_ratio * num_points)
    num_random_points = num_points - num_uncertain_points
    _, idx = jax.lax.top_k(point_uncertainties[:, 0, :], num_uncertain_points)
    picked = jnp.take_along_axis(point_coords, idx[:, :, None], axis=1)       # [N, k, 2]
    if num_random_points > 0:
        rand_coords = jax.random.uniform(k2, (N, num_random_points, 2), dtype=jnp.float32)
        picked = jnp.concatenate([picked, rand_coords], axis=1)
    return picked


# ----------------------------------------------------------------------------
# SetCriterion (forward semantics)
# ----------------------------------------------------------------------------
class SetCriterionPallas:
    def __init__(self, num_classes, eos_coef, losses, num_points,
                 oversample_ratio, importance_sample_ratio):
        self.num_classes = num_classes
        self.eos_coef = eos_coef
        self.losses = losses
        self.num_points = num_points
        self.oversample_ratio = oversample_ratio
        self.importance_sample_ratio = importance_sample_ratio
        # empty_weight buffer: ones(num_classes + 1), last = eos_coef
        self.empty_weight = jnp.ones(num_classes + 1, jnp.float32).at[-1].set(eos_coef)

    # ---- CE inputs: merged ins+id rows, class axis on sublanes (Cpad=8), rows lane-dense ----
    def _prepare_label_inputs(self, outputs, targets, indices_id, indices_ins):
        B = len(outputs)
        c_ins_max = max(out['pred_ins_logits'].shape[-1] for out in outputs)
        c_id = self.num_classes + 1
        cpad = _round_up(max(c_ins_max, c_id), 8)     # sublane padding only (NOT 128 lanes)

        rows_logits, rows_tgt, rows_w, seg_ids = [], [], [], []
        # per-output "ins" rows: one segment per image (per-image weighted mean).
        for b, (out, t, (src, tgt)) in enumerate(zip(outputs, targets, indices_ins)):
            logits = out['pred_ins_logits'][0].astype(jnp.float32)            # [Q, K+1]
            Q, C = logits.shape
            K = out['num_classes']
            rows_logits.append(jnp.pad(logits, ((0, 0), (0, cpad - C)),
                                       constant_values=_NEG_LOGIT))
            src_a = jnp.asarray(src, jnp.int32)
            tgt_a = jnp.asarray(tgt, jnp.int32)
            tcls = jnp.full((Q,), K, jnp.int32).at[src_a].set(t['labels_t'][tgt_a])
            rows_tgt.append(tcls)
            weight = jnp.ones(K + 1, jnp.float32).at[-1].set(self.eos_coef)
            rows_w.append(weight[tcls])
            seg_ids.append(jnp.full((Q,), b, jnp.int32))
        # "id" rows: one shared segment (single weighted mean over all images).
        for out, (src, _) in zip(outputs, indices_id):
            logits = out['pred_id_logits'][0].astype(jnp.float32)             # [Q, num_classes+1]
            Q, C = logits.shape
            rows_logits.append(jnp.pad(logits, ((0, 0), (0, cpad - C)),
                                       constant_values=_NEG_LOGIT))
            src_a = jnp.asarray(src, jnp.int32)
            # target_id_classes_o = zeros_like(labels[tgt]) -> class 0 for matched queries
            tcls = jnp.full((Q,), self.num_classes, jnp.int32).at[src_a].set(0)
            rows_tgt.append(tcls)
            rows_w.append(self.empty_weight[tcls])
            seg_ids.append(jnp.full((Q,), B, jnp.int32))

        logits = jnp.concatenate(rows_logits, axis=0)                         # [R, cpad]
        tgt = jnp.concatenate(rows_tgt)
        w = jnp.concatenate(rows_w).astype(jnp.float32)
        segid = jnp.concatenate(seg_ids)
        R = logits.shape[0]
        Rpad = _round_up(R, 128)
        if Rpad > R:
            logits = jnp.pad(logits, ((0, Rpad - R), (0, 0)))                 # weight 0 -> no effect
            tgt = jnp.pad(tgt, (0, Rpad - R))
            w = jnp.pad(w, (0, Rpad - R))
            segid = jnp.pad(segid, (0, Rpad - R), constant_values=-1)

        n_seg_rows = _round_up(B + 1, 8)
        ce_logits_t = logits.T                                                # [cpad, Rpad]
        ce_tgt = tgt[None, :].astype(jnp.int32)                               # [1, Rpad]
        ce_w = w[None, :]                                                     # [1, Rpad]
        ce_seg = (segid[None, :] == jnp.arange(n_seg_rows)[:, None]).astype(jnp.float32)
        return ce_logits_t, ce_tgt, ce_w, ce_seg, B

    # ---- mask inputs: gather-based point sampling, bf16, padded to (Mpad, Ppad) ----
    def _prepare_mask_inputs(self, outputs, targets, indices_id, indices_ins, key):
        src_ins_masks = jnp.concatenate(
            [out['pred_ins_masks'][0, jnp.asarray(src, jnp.int32)]
             for out, (src, _) in zip(outputs, indices_ins)], axis=0)
        src_id_masks = jnp.concatenate(
            [out['pred_id_masks'][0, jnp.asarray(src, jnp.int32)]
             for out, (src, _) in zip(outputs, indices_id)], axis=0)
        tgt_ins_masks = jnp.concatenate(
            [t['masks'][jnp.asarray(tgt, jnp.int32)]
             for t, (_, tgt) in zip(targets, indices_ins)], axis=0)
        tgt_id_masks = jnp.concatenate(
            [t['masks'][jnp.asarray(tgt, jnp.int32)]
             for t, (_, tgt) in zip(targets, indices_id)], axis=0)

        src_masks = jnp.concatenate([src_ins_masks, src_id_masks], axis=0)[:, None]    # [M,1,H,W]
        target_masks = jnp.concatenate([tgt_ins_masks, tgt_id_masks],
                                       axis=0)[:, None].astype(src_masks.dtype)

        point_coords = get_uncertain_point_coords_with_randomness(
            jax.lax.stop_gradient(src_masks.astype(jnp.float32)), calculate_uncertainty,
            self.num_points, self.oversample_ratio, self.importance_sample_ratio, key)

        # Shared coords -> src and target masks sampled with ONE gather pass.
        both = jnp.concatenate([src_masks, target_masks], axis=1)                      # [M,2,H,W]
        sampled = point_sample(both, point_coords)                                     # [M,2,P]
        point_logits = sampled[:, 0].astype(jnp.float32)
        point_labels = sampled[:, 1].astype(jnp.float32)

        M = point_logits.shape[0]
        P = self.num_points
        ppad = _round_up(P, 128)
        tile_m = min(128, _round_up(M, 16))
        mpad = _round_up(M, tile_m)
        point_logits = jnp.pad(point_logits, ((0, mpad - M), (0, ppad - P)),
                               constant_values=_NEG_POINT)       # pads -> exactly 0 bce/sigmoid/dice
        point_labels = jnp.pad(point_labels, ((0, mpad - M), (0, ppad - P)),
                               constant_values=0.0)
        # bf16 streaming halves HBM traffic of the dominant input; upcast inside the kernel.
        return point_logits.astype(jnp.bfloat16), point_labels.astype(jnp.bfloat16), tile_m

    def forward(self, outputs, tar_targets, indices_id, indices_ins, key):
        # TODO(synk): Hungarian matcher (scipy linear_sum_assignment) is external; indices provided.
        new_outputs = []
        for out in outputs:
            new_outputs.append({
                'pred_id_logits': out['pred_id_logits'],
                'pred_ins_logits': out['pred_ins_logits'],
                'pred_id_masks': out['pred_id_masks'],
                'pred_ins_masks': out['pred_ins_masks'],
                'num_classes': out['ref_sem_labels_t'].shape[0],
            })

        # TODO(synk): distributed all_reduce of num_masks / get_world_size omitted (world_size=1).
        num_masks_id = sum(len(i[0]) for i in indices_id)
        num_masks_ins = sum(len(i[0]) for i in indices_ins)
        num_masks = float(max(num_masks_id + num_masks_ins, 1))

        ce_logits_t, ce_tgt, ce_w, ce_seg, n_img = self._prepare_label_inputs(
            new_outputs, tar_targets, indices_id, indices_ins)
        pt_logits, pt_labels, tile_m = self._prepare_mask_inputs(
            new_outputs, tar_targets, indices_id, indices_ins, key)

        # Single fused, gridded Pallas launch for all four loss reductions.
        ce_ins, ce_id, lm, ld = fused_set_criterion_losses(
            ce_logits_t, ce_tgt, ce_w, ce_seg, pt_logits, pt_labels,
            n_img=n_img, tile_m=tile_m, num_points=self.num_points, num_masks=num_masks)

        losses = {}
        if 'labels' in self.losses:
            losses['loss_ce_ins'] = ce_ins
            losses['loss_ce_id'] = ce_id
        if 'masks' in self.losses:
            losses['loss_mask'] = lm
            losses['loss_dice'] = ld
        return losses


# ----------------------------------------------------------------------------
# main
# ----------------------------------------------------------------------------
if __name__ == "__main__":
    B = 2            # number of images / output dicts
    Q = 8            # queries
    K_INS = 6        # per-output num_classes (ref_sem_labels_t.shape[0])
    NUM_CLASSES_ID = 4
    H = W = 16
    NT = 4           # targets per image
    NUM_POINTS = 16
    OVERSAMPLE_RATIO = 3
    IMPORTANCE_SAMPLE_RATIO = 0.75
    EOS_COEF = 0.1

    key = jax.random.PRNGKey(0)
    keys = jax.random.split(key, 16)

    # bf16 pad-value sanity: -1e4 still drives sigmoid/bce to exactly 0 after upcast.
    _pad = jnp.asarray(_NEG_POINT, jnp.bfloat16).astype(jnp.float32)
    assert float(jax.nn.sigmoid(_pad)) == 0.0
    assert float(jnp.log1p(jnp.exp(-jnp.abs(_pad)))) == 0.0

    outputs = []
    for i in range(B):
        outputs.append({
            'pred_ins_logits': jax.random.normal(keys[4 * i + 0], (1, Q, K_INS + 1), jnp.float32),
            'pred_id_logits': jax.random.normal(keys[4 * i + 1], (1, Q, NUM_CLASSES_ID + 1), jnp.float32),
            'pred_ins_masks': jax.random.normal(keys[4 * i + 2], (1, Q, H, W), jnp.float32),
            'pred_id_masks': jax.random.normal(keys[4 * i + 3], (1, Q, H, W), jnp.float32),
            'ref_sem_labels_t': jnp.arange(K_INS, dtype=jnp.int32),
        })

    tar_targets = []
    for i in range(B):
        labels = jax.random.randint(keys[8 + i], (NT,), 0, K_INS, dtype=jnp.int32)
        masks = (jax.random.uniform(keys[10 + i], (NT, H, W)) > 0.5).astype(jnp.float32)
        tar_targets.append({'labels_t': labels, 'masks': masks})

    # Deterministic (src, tgt) match indices per image.
    indices_ins = [([0, 2, 5], [1, 0, 3]), ([1, 3, 4], [2, 1, 0])]
    indices_id = [([0, 4], [0, 2]), ([2, 6], [1, 3])]

    criterion = SetCriterionPallas(
        num_classes=NUM_CLASSES_ID, eos_coef=EOS_COEF, losses=['labels', 'masks'],
        num_points=NUM_POINTS, oversample_ratio=OVERSAMPLE_RATIO,
        importance_sample_ratio=IMPORTANCE_SAMPLE_RATIO)

    losses = criterion.forward(outputs, tar_targets, indices_id, indices_ins, keys[12])
    losses = {k: jax.block_until_ready(v) for k, v in losses.items()}

    assert set(losses.keys()) == {'loss_ce_ins', 'loss_ce_id', 'loss_mask', 'loss_dice'}
    assert all(jnp.isfinite(v) for v in losses.values())
    print("KERNEL_OK")
</pallas_src>

<mosaic_0001>
module attributes {stable_mosaic.version = 11 : i64} {
  func.func @_fused_loss_kernel(%arg0: i32, %arg1: memref<8x128xf32, #tpu.memory_space<vmem>>, %arg2: memref<1x128xi32, #tpu.memory_space<vmem>>, %arg3: memref<1x128xf32, #tpu.memory_space<vmem>>, %arg4: memref<8x128xf32, #tpu.memory_space<vmem>>, %arg5: memref<16x128xbf16, #tpu.memory_space<vmem>>, %arg6: memref<16x128xbf16, #tpu.memory_space<vmem>>, %arg7: memref<1x128xf32, #tpu.memory_space<vmem>>) attributes {dimension_semantics = [#tpu.dimension_semantics<parallel>], iteration_bounds = array<i64: 1>, scalar_prefetch = 0 : i64, scratch_operands = 0 : i64, tpu.core_type = #tpu.core_type<tc>, window_params = [{pipeline_mode = #tpu.pipeline_mode<synchronous>, transform_indices = @transform_0, window_bounds = array<i64: 8, 128>}, {pipeline_mode = #tpu.pipeline_mode<synchronous>, transform_indices = @transform_1, window_bounds = array<i64: 1, 128>}, {pipeline_mode = #tpu.pipeline_mode<synchronous>, transform_indices = @transform_2, window_bounds = array<i64: 1, 128>}, {pipeline_mode = #tpu.pipeline_mode<synchronous>, transform_indices = @transform_3, window_bounds = array<i64: 8, 128>}, {transform_indices = @transform_4, window_bounds = array<i64: 16, 128>}, {transform_indices = @transform_5, window_bounds = array<i64: 16, 128>}, {transform_indices = @transform_6, window_bounds = array<i64: 1, 128>}]} {
    %0 = tpu.iota {dimensions = array<i32: 1>} : vector<1x128xi32>
    %c0 = arith.constant 0 : index
    %c0_0 = arith.constant 0 : index
    %1 = vector.load %arg5[%c0, %c0_0] : memref<16x128xbf16, #tpu.memory_space<vmem>>, vector<16x128xbf16>
    %2 = arith.extf %1 : vector<16x128xbf16> to vector<16x128xf32>
    %c0_1 = arith.constant 0 : index
    %c0_2 = arith.constant 0 : index
    %3 = vector.load %arg6[%c0_1, %c0_2] : memref<16x128xbf16, #tpu.memory_space<vmem>>, vector<16x128xbf16>
    %4 = arith.extf %3 : vector<16x128xbf16> to vector<16x128xf32>
    %5 = math.absf %2 : vector<16x128xf32>
    %cst = arith.constant 0.000000e+00 : f32
    %6 = vector.broadcast %cst : f32 to vector<16x128xf32>
    %7 = arith.subf %6, %5 : vector<16x128xf32>
    %8 = math.exp %7 : vector<16x128xf32>
    %cst_3 = arith.constant 0.000000e+00 : f32
    %9 = vector.broadcast %cst_3 : f32 to vector<16x128xf32>
    %10 = arith.maximumf %2, %9 : vector<16x128xf32>
    %11 = arith.mulf %2, %4 : vector<16x128xf32>
    %12 = arith.subf %10, %11 : vector<16x128xf32>
    %13 = math.log1p %8 : vector<16x128xf32>
    %14 = arith.addf %12, %13 : vector<16x128xf32>
    %cst_4 = arith.constant dense<0.000000e+00> : vector<16xf32>
    %15 = vector.multi_reduction <add>, %14, %cst_4 [1] : vector<16x128xf32> to vector<16xf32>
    %16 = vector.shape_cast %15 : vector<16xf32> to vector<16x1xf32>
    %cst_5 = arith.constant dense<0.000000e+00> : vector<1xf32>
    %17 = vector.multi_reduction <add>, %16, %cst_5 [0] : vector<16x1xf32> to vector<1xf32>
    %18 = vector.shape_cast %17 : vector<1xf32> to vector<1x1xf32>
    %cst_6 = arith.constant 0.000000e+00 : f32
    %19 = vector.broadcast %cst_6 : f32 to vector<16x128xf32>
    %20 = arith.cmpf oge, %2, %19 : vector<16x128xf32>
    %cst_7 = arith.constant 1.000000e+00 : f32
    %21 = vector.broadcast %cst_7 : f32 to vector<16x128xf32>
    %22 = arith.select %20, %21, %8 : vector<16x128xi1>, vector<16x128xf32>
    %cst_8 = arith.constant 1.000000e+00 : f32
    %23 = vector.broadcast %cst_8 : f32 to vector<16x128xf32>
    %24 = arith.addf %23, %8 : vector<16x128xf32>
    %25 = arith.divf %22, %24 : vector<16x128xf32>
    %26 = arith.mulf %25, %4 : vector<16x128xf32>
    %cst_9 = arith.constant dense<0.000000e+00> : vector<16xf32>
    %27 = vector.multi_reduction <add>, %26, %cst_9 [1] : vector<16x128xf32> to vector<16xf32>
    %28 = vector.shape_cast %27 : vector<16xf32> to vector<16x1xf32>
    %cst_10 = arith.constant 2.000000e+00 : f32
    %29 = vector.broadcast %cst_10 : f32 to vector<16x1xf32>
    %30 = arith.mulf %29, %28 : vector<16x1xf32>
    %cst_11 = arith.constant dense<0.000000e+00> : vector<16xf32>
    %31 = vector.multi_reduction <add>, %25, %cst_11 [1] : vector<16x128xf32> to vector<16xf32>
    %32 = vector.shape_cast %31 : vector<16xf32> to vector<16x1xf32>
    %cst_12 = arith.constant dense<0.000000e+00> : vector<16xf32>
    %33 = vector.multi_reduction <add>, %4, %cst_12 [1] : vector<16x128xf32> to vector<16xf32>
    %34 = vector.shape_cast %33 : vector<16xf32> to vector<16x1xf32>
    %35 = arith.addf %32, %34 : vector<16x1xf32>
    %cst_13 = arith.constant 1.000000e+00 : f32
    %36 = vector.broadcast %cst_13 : f32 to vector<16x1xf32>
    %37 = arith.addf %30, %36 : vector<16x1xf32>
    %cst_14 = arith.constant 1.000000e+00 : f32
    %38 = vector.broadcast %cst_14 : f32 to vector<16x1xf32>
    %39 = arith.addf %35, %38 : vector<16x1xf32>
    %40 = arith.divf %37, %39 : vector<16x1xf32>
    %cst_15 = arith.constant 1.000000e+00 : f32
    %41 = vector.broadcast %cst_15 : f32 to vector<16x1xf32>
    %42 = arith.subf %41, %40 : vector<16x1xf32>
    %cst_16 = arith.constant dense<0.000000e+00> : vector<1xf32>
    %43 = vector.multi_reduction <add>, %42, %cst_16 [0] : vector<16x1xf32> to vector<1xf32>
    %44 = vector.shape_cast %43 : vector<1xf32> to vector<1x1xf32>
    %c0_i32 = arith.constant 0 : i32
    %45 = vector.broadcast %c0_i32 : i32 to vector<1x128xi32>
    %46 = arith.cmpi eq, %0, %45 : vector<1x128xi32>
    %cst_17 = arith.constant 0.000000e+00 : f32
    %47 = vector.shape_cast %18 : vector<1x1xf32> to vector<1x1xf32>
    %48 = vector.broadcast %47 : vector<1x1xf32> to vector<1x128xf32>
    %49 = vector.broadcast %cst_17 : f32 to vector<1x128xf32>
    %50 = arith.select %46, %48, %49 : vector<1x128xi1>, vector<1x128xf32>
    %c1_i32 = arith.constant 1 : i32
    %51 = vector.broadcast %c1_i32 : i32 to vector<1x128xi32>
    %52 = arith.cmpi eq, %0, %51 : vector<1x128xi32>
    %cst_18 = arith.constant 0.000000e+00 : f32
    %53 = vector.shape_cast %44 : vector<1x1xf32> to vector<1x1xf32>
    %54 = vector.broadcast %53 : vector<1x1xf32> to vector<1x128xf32>
    %55 = vector.broadcast %cst_18 : f32 to vector<1x128xf32>
    %56 = arith.select %52, %54, %55 : vector<1x128xi1>, vector<1x128xf32>
    %57 = arith.addf %50, %56 : vector<1x128xf32>
    %c0_19 = arith.constant 0 : index
    %c0_20 = arith.constant 0 : index
    %58 = vector.load %arg7[%c0_19, %c0_20] : memref<1x128xf32, #tpu.memory_space<vmem>>, vector<1x128xf32>
    tpu.vector_store %arg7[%c0_19, %c0_20], %57 {strides = array<i32>} : memref<1x128xf32, #tpu.memory_space<vmem>>, vector<1x128xf32>,
    %c0_i32_21 = arith.constant 0 : i32
    %59 = arith.cmpi eq, %arg0, %c0_i32_21 : i32
    %60 = arith.extui %59 : i1 to i32
    %c0_i32_22 = arith.constant 0 : i32
    %61 = arith.cmpi ne, %60, %c0_i32_22 : i32
    scf.if %61 {
      %c0_23 = arith.constant 0 : index
      %c0_24 = arith.constant 0 : index
      %62 = vector.load %arg1[%c0_23, %c0_24] : memref<8x128xf32, #tpu.memory_space<vmem>>, vector<8x128xf32>
      %cst_25 = arith.constant dense<0xFF800000> : vector<128xf32>
      %63 = vector.multi_reduction <maximumf>, %62, %cst_25 [0] : vector<8x128xf32> to vector<128xf32>
      %64 = vector.shape_cast %63 : vector<128xf32> to vector<1x128xf32>
      %65 = vector.broadcast %64 : vector<1x128xf32> to vector<8x128xf32>
      %66 = arith.subf %62, %65 : vector<8x128xf32>
      %67 = math.exp %66 : vector<8x128xf32>
      %cst_26 = arith.constant dense<0.000000e+00> : vector<128xf32>
      %68 = vector.multi_reduction <add>, %67, %cst_26 [0] : vector<8x128xf32> to vector<128xf32>
      %69 = vector.shape_cast %68 : vector<128xf32> to vector<1x128xf32>
      %70 = math.log %69 : vector<1x128xf32>
      %71 = arith.addf %70, %64 : vector<1x128xf32>
      %72 = tpu.iota {dimensions = array<i32: 0>} : vector<8x128xi32>
      %c0_27 = arith.constant 0 : index
      %c0_28 = arith.constant 0 : index
      %73 = vector.load %arg2[%c0_27, %c0_28] : memref<1x128xi32, #tpu.memory_space<vmem>>, vector<1x128xi32>
      %74 = vector.broadcast %73 : vector<1x128xi32> to vector<8x128xi32>
      %75 = arith.cmpi eq, %72, %74 : vector<8x128xi32>
      %cst_29 = arith.constant 0.000000e+00 : f32
      %76 = vector.broadcast %cst_29 : f32 to vector<8x128xf32>
      %77 = arith.select %75, %62, %76 : vector<8x128xi1>, vector<8x128xf32>
      %cst_30 = arith.constant dense<0.000000e+00> : vector<128xf32>
      %78 = vector.multi_reduction <add>, %77, %cst_30 [0] : vector<8x128xf32> to vector<128xf32>
      %79 = vector.shape_cast %78 : vector<128xf32> to vector<1x128xf32>
      %c0_31 = arith.constant 0 : index
      %c0_32 = arith.constant 0 : index
      %80 = vector.load %arg3[%c0_31, %c0_32] : memref<1x128xf32, #tpu.memory_space<vmem>>, vector<1x128xf32>
      %81 = arith.subf %71, %79 : vector<1x128xf32>
      %82 = arith.mulf %81, %80 : vector<1x128xf32>
      %c0_33 = arith.constant 0 : index
      %c0_34 = arith.constant 0 : index
      %83 = vector.load %arg4[%c0_33, %c0_34] : memref<8x128xf32, #tpu.memory_space<vmem>>, vector<8x128xf32>
      %84 = vector.broadcast %82 : vector<1x128xf32> to vector<8x128xf32>
      %85 = arith.mulf %83, %84 : vector<8x128xf32>
      %cst_35 = arith.constant dense<0.000000e+00> : vector<8xf32>
      %86 = vector.multi_reduction <add>, %85, %cst_35 [1] : vector<8x128xf32> to vector<8xf32>
      %87 = vector.shape_cast %86 : vector<8xf32> to vector<8x1xf32>
      %88 = vector.broadcast %80 : vector<1x128xf32> to vector<8x128xf32>
      %89 = arith.mulf %83, %88 : vector<8x128xf32>
      %cst_36 = arith.constant dense<0.000000e+00> : vector<8xf32>
      %90 = vector.multi_reduction <add>, %89, %cst_36 [1] : vector<8x128xf32> to vector<8xf32>
      %91 = vector.shape_cast %90 : vector<8xf32> to vector<8x1xf32>
      %cst_37 = arith.constant 9.99999996E-13 : f32
      %92 = vector.broadcast %cst_37 : f32 to vector<8x1xf32>
      %93 = arith.maximumf %91, %92 : vector<8x1xf32>
      %94 = arith.divf %87, %93 : vector<8x1xf32>
      %95 = tpu.iota {dimensions = array<i32: 0>} : vector<8x1xi32>
      %c2_i32 = arith.constant 2 : i32
      %96 = vector.broadcast %c2_i32 : i32 to vector<8x1xi32>
      %97 = arith.cmpi slt, %95, %96 : vector<8x1xi32>
      %cst_38 = arith.constant 0.000000e+00 : f32
      %98 = vector.broadcast %cst_38 : f32 to vector<8x1xf32>
      %99 = arith.select %97, %94, %98 : vector<8x1xi1>, vector<8x1xf32>
      %cst_39 = arith.constant dense<0.000000e+00> : vector<1xf32>
      %100 = vector.multi_reduction <add>, %99, %cst_39 [0] : vector<8x1xf32> to vector<1xf32>
      %101 = vector.shape_cast %100 : vector<1xf32> to vector<1x1xf32>
      %cst_40 = arith.constant 5.000000e-01 : f32
      %102 = vector.broadcast %cst_40 : f32 to vector<1x1xf32>
      %103 = arith.mulf %101, %102 : vector<1x1xf32>
      %c2_i32_41 = arith.constant 2 : i32
      %104 = vector.broadcast %c2_i32_41 : i32 to vector<8x1xi32>
      %105 = arith.cmpi eq, %95, %104 : vector<8x1xi32>
      %cst_42 = arith.constant 0.000000e+00 : f32
      %106 = vector.broadcast %cst_42 : f32 to vector<8x1xf32>
      %107 = arith.select %105, %94, %106 : vector<8x1xi1>, vector<8x1xf32>
      %cst_43 = arith.constant dense<0.000000e+00> : vector<1xf32>
      %108 = vector.multi_reduction <add>, %107, %cst_43 [0] : vector<8x1xf32> to vector<1xf32>
      %109 = vector.shape_cast %108 : vector<1xf32> to vector<1x1xf32>
      %c0_44 = arith.constant 0 : index
      %c0_45 = arith.constant 0 : index
      %110 = vector.load %arg7[%c0_44, %c0_45] : memref<1x128xf32, #tpu.memory_space<vmem>>, vector<1x128xf32>
      %c2_i32_46 = arith.constant 2 : i32
      %111 = vector.broadcast %c2_i32_46 : i32 to vector<1x128xi32>
      %112 = arith.cmpi eq, %0, %111 : vector<1x128xi32>
      %cst_47 = arith.constant 0.000000e+00 : f32
      %113 = vector.shape_cast %103 : vector<1x1xf32> to vector<1x1xf32>
      %114 = vector.broadcast %113 : vector<1x1xf32> to vector<1x128xf32>
      %115 = vector.broadcast %cst_47 : f32 to vector<1x128xf32>
      %116 = arith.select %112, %114, %115 : vector<1x128xi1>, vector<1x128xf32>
      %117 = arith.addf %110, %116 : vector<1x128xf32>
      %c3_i32 = arith.constant 3 : i32
      %118 = vector.broadcast %c3_i32 : i32 to vector<1x128xi32>
      %119 = arith.cmpi eq, %0, %118 : vector<1x128xi32>
      %cst_48 = arith.constant 0.000000e+00 : f32
      %120 = vector.shape_cast %109 : vector<1x1xf32> to vector<1x1xf32>
      %121 = vector.broadcast %120 : vector<1x1xf32> to vector<1x128xf32>
      %122 = vector.broadcast %cst_48 : f32 to vector<1x128xf32>
      %123 = arith.select %119, %121, %122 : vector<1x128xi1>, vector<1x128xf32>
      %124 = arith.addf %117, %123 : vector<1x128xf32>
      %c0_49 = arith.constant 0 : index
      %c0_50 = arith.constant 0 : index
      %125 = vector.load %arg7[%c0_49, %c0_50] : memref<1x128xf32, #tpu.memory_space<vmem>>, vector<1x128xf32>
      tpu.vector_store %arg7[%c0_49, %c0_50], %124 {strides = array<i32>} : memref<1x128xf32, #tpu.memory_space<vmem>>, vector<1x128xf32>,
    } else {
    }
    return
  }
  func.func @transform_0(%arg0: i32) -> (i32, i32) {
    %c0_i32 = arith.constant 0 : i32
    %c0_i32_0 = arith.constant 0 : i32
    %c0_i32_1 = arith.constant 0 : i32
    return %c0_i32, %c0_i32_0 : i32, i32
  }
  func.func @transform_1(%arg0: i32) -> (i32, i32) {
    %c0_i32 = arith.constant 0 : i32
    %c0_i32_0 = arith.constant 0 : i32
    %c0_i32_1 = arith.constant 0 : i32
    return %c0_i32, %c0_i32_0 : i32, i32
  }
  func.func @transform_2(%arg0: i32) -> (i32, i32) {
    %c0_i32 = arith.constant 0 : i32
    %c0_i32_0 = arith.constant 0 : i32
    %c0_i32_1 = arith.constant 0 : i32
    return %c0_i32, %c0_i32_0 : i32, i32
  }
  func.func @transform_3(%arg0: i32) -> (i32, i32) {
    %c0_i32 = arith.constant 0 : i32
    %c0_i32_0 = arith.constant 0 : i32
    %c0_i32_1 = arith.constant 0 : i32
    return %c0_i32, %c0_i32_0 : i32, i32
  }
  func.func @transform_4(%arg0: i32) -> (i32, i32) {
    %c0_i32 = arith.constant 0 : i32
    %c0_i32_0 = arith.constant 0 : i32
    return %arg0, %c0_i32 : i32, i32
  }
  func.func @transform_5(%arg0: i32) -> (i32, i32) {
    %c0_i32 = arith.constant 0 : i32
    %c0_i32_0 = arith.constant 0 : i32
    return %arg0, %c0_i32 : i32, i32
  }
  func.func @transform_6(%arg0: i32) -> (i32, i32) {
    %c0_i32 = arith.constant 0 : i32
    %c0_i32_0 = arith.constant 0 : i32
    return %arg0, %c0_i32 : i32, i32
  }
}

</mosaic_0001>

<llo_original>
// kernel: tpu_custom_call.1
$region0: #{tpu_custom_call.1}
  #allocation0 [shape = 'u32[]', space=smem, size = 0x4, offset = 0x4, fixed_abs, tag = 'smem constant byte address 0x4 - core index']
  #allocation1 [shape = 'u32[72,128]{1,0:T(1,128)}', space=vmem, size = 0x9000, scoped, tag = 'internal scratch']
  %s0 = inlined_call_operand.hbm [shape: f32[8,128], index: 0, kind: input, shape index: {}]
  %s1 = inlined_call_operand.hbm [shape: s32[1,128], index: 1, kind: input, shape index: {}]
  %s2 = inlined_call_operand.vmem [shape: f32[1,128], index: 2, kind: input, shape index: {}]
  %s3 = inlined_call_operand.hbm [shape: f32[8,128], index: 3, kind: input, shape index: {}]
  %s4 = inlined_call_operand.hbm [shape: bf16[16,128], index: 4, kind: input, shape index: {}]
  %s5 = inlined_call_operand.hbm [shape: bf16[16,128], index: 5, kind: input, shape index: {}]
  %s6 = inlined_call_operand.hbm [shape: f32[1,128], index: 6, kind: output, shape index: {}]
  %s7 = sld [smem:[#allocation0]]
  $region58: #{tpu_custom_call.1} parent=0
    _
  %s9 = ssub.s32 1, %s7
  %s10 = scalar_select 0, %s9, %s7
  $region1: #{tpu_custom_call.1} parent=0
    #allocation2 [shape = 'u8[4096]{0}', space=vmem, size = 0x1000, scoped, tag = 'input window, operand 0, single buffered']
    #allocation3 [shape = 's32[1]{0}', space=sflag, size = 0x4, scoped, tag = 'scoped memory for tpu_custom_call.1']
    #allocation4 [shape = 's32[1]{0}', space=sflag, size = 0x4, scoped, tag = 'scoped memory for tpu_custom_call.1']
    #allocation5 [shape = 'u8[512]{0}', space=vmem, size = 0x400, scoped, tag = 'input window, operand 1, single buffered']
    #allocation6 [shape = 's32[1]{0}', space=sflag, size = 0x4, scoped, tag = 'scoped memory for tpu_custom_call.1']
    #allocation7 [shape = 'u8[4096]{0}', space=vmem, size = 0x1000, scoped, tag = 'input window, operand 3, single buffered']
    #allocation8 [shape = 'u8[4096]{0}', space=vmem, size = 0x1000, scoped, tag = 'input window, operand 4, single buffered']
    #allocation9 [shape = 's32[1]{0}', space=sflag, size = 0x4, scoped, tag = 'scoped memory for tpu_custom_call.1']
    #allocation10 [shape = 'u8[4096]{0}', space=vmem, size = 0x1000, scoped, tag = 'input window, operand 5, single buffered']
    #allocation11 [shape = 'u8[512]{0}', space=vmem, size = 0x400, scoped, tag = 'output window, operand 0, single buffered']
    %11 = vsyncpa [#allocation3], 0
    %12 = vsyncpa [#allocation6], 0
    %13 = vsyncpa [#allocation9], 0
    %14 = vsyncpa [#allocation4], 0
    // Predicated region
    $region2: #{tpu_custom_call.1} parent=1 // pred_check
      _
    $region3: #{tpu_custom_call.1} parent=1 // pred_check_branch
      %16 = sbr.rel (0) target = $region5
    $region4: #{tpu_custom_call.1} parent=1 // pred_region
      %18 = vsyncadd [#allocation3], 0
      %s20 = sshll.u32 %s0, 4
      %s21 = int_to_ptr.hbm [resolvable:$true] %s20
      %s22 = sshll.u32 [#allocation2], 4
      %s23 = int_to_ptr.vmem [resolvable:$true] %s22
      %25 = dma.hbm_to_vmem [thread:$0]  %s21, 128, %s23, [#allocation3]
    $region5: #{tpu_custom_call.1} parent=1 // pred_fallthru
      _
    // Predicated region
    $region6: #{tpu_custom_call.1} parent=1 // pred_check
      _
    $region7: #{tpu_custom_call.1} parent=1 // pred_check_branch
      %27 = sbr.rel (0) target = $region9
    $region8: #{tpu_custom_call.1} parent=1 // pred_region
      %29 = vsyncadd [#allocation6], 0
      %s31 = sshll.u32 %s1, 4
      %s32 = int_to_ptr.hbm [resolvable:$true] %s31
      %s33 = sshll.u32 [#allocation5], 4
      %s34 = int_to_ptr.vmem [resolvable:$true] %s33
      %36 = dma.hbm_to_vmem [thread:$0]  %s32, 16, %s34, [#allocation6]
    $region9: #{tpu_custom_call.1} parent=1 // pred_fallthru
      _
    // Predicated region
    $region10: #{tpu_custom_call.1} parent=1 // pred_check
      _
    $region11: #{tpu_custom_call.1} parent=1 // pred_check_branch
      %38 = sbr.rel (0) target = $region13
    $region12: #{tpu_custom_call.1} parent=1 // pred_region
      _
    $region13: #{tpu_custom_call.1} parent=1 // pred_fallthru
      _
    // Predicated region
    $region14: #{tpu_custom_call.1} parent=1 // pred_check
      _
    $region15: #{tpu_custom_call.1} parent=1 // pred_check_branch
      %40 = sbr.rel (0) target = $region17
    $region16: #{tpu_custom_call.1} parent=1 // pred_region
      %42 = vsyncadd [#allocation6], 0
      %s44 = sshll.u32 %s3, 4
      %s45 = int_to_ptr.hbm [resolvable:$true] %s44
      %s46 = sshll.u32 [#allocation7], 4
      %s47 = int_to_ptr.vmem [resolvable:$true] %s46
      %49 = dma.hbm_to_vmem [thread:$0]  %s45, 128, %s47, [#allocation6]
    $region17: #{tpu_custom_call.1} parent=1 // pred_fallthru
      _
    // Predicated region
    $region18: #{tpu_custom_call.1} parent=1 // pred_check
      _
    $region19: #{tpu_custom_call.1} parent=1 // pred_check_branch
      %51 = sbr.rel (0) target = $region21
    $region20: #{tpu_custom_call.1} parent=1 // pred_region
      %53 = vsyncadd [#allocation9], 0
      %s54 = sshll.u32 %s4, 4
      %s55 = int_to_ptr.hbm [resolvable:$true] %s54
      %s56 = sshll.u32 [#allocation8], 4
      %s57 = int_to_ptr.vmem [resolvable:$true] %s56
      %62 = dma.hbm_to_vmem [thread:$0]  %s55, 128, %s57, [#allocation9], 64, 64, 4
    $region21: #{tpu_custom_call.1} parent=1 // pred_fallthru
      _
    // Predicated region
    $region22: #{tpu_custom_call.1} parent=1 // pred_check
      _
    $region23: #{tpu_custom_call.1} parent=1 // pred_check_branch
      %64 = sbr.rel (0) target = $region25
    $region24: #{tpu_custom_call.1} parent=1 // pred_region
      %66 = vsyncadd [#allocation9], 0
      %s67 = sshll.u32 %s5, 4
      %s68 = int_to_ptr.hbm [resolvable:$true] %s67
      %s69 = sshll.u32 [#allocation10], 4
      %s70 = int_to_ptr.vmem [resolvable:$true] %s69
      %75 = dma.hbm_to_vmem [thread:$0]  %s68, 128, %s70, [#allocation9], 64, 64, 4
    $region25: #{tpu_custom_call.1} parent=1 // pred_fallthru
      _
    // Predicated region
    $region26: #{tpu_custom_call.1} parent=1 // pred_check
      _
    $region27: #{tpu_custom_call.1} parent=1 // pred_check_branch
      %77 = sbr.rel (0) target = $region29
    $region28: #{tpu_custom_call.1} parent=1 // pred_region
      %79 = dma.done [#allocation3], 128
    $region29: #{tpu_custom_call.1} parent=1 // pred_fallthru
      _
    // Predicated region
    $region30: #{tpu_custom_call.1} parent=1 // pred_check
      _
    $region31: #{tpu_custom_call.1} parent=1 // pred_check_branch
      %81 = sbr.rel (0) target = $region33
    $region32: #{tpu_custom_call.1} parent=1 // pred_region
      %83 = dma.done [#allocation6], 16
    $region33: #{tpu_custom_call.1} parent=1 // pred_fallthru
      _
    // Predicated region
    $region34: #{tpu_custom_call.1} parent=1 // pred_check
      _
    $region35: #{tpu_custom_call.1} parent=1 // pred_check_branch
      %85 = sbr.rel (0) target = $region37
    $region36: #{tpu_custom_call.1} parent=1 // pred_region
      %87 = dma.done [#allocation6], 128
    $region37: #{tpu_custom_call.1} parent=1 // pred_fallthru
      _
    // Predicated region
    $region38: #{tpu_custom_call.1} parent=1 // pred_check
      _
    $region39: #{tpu_custom_call.1} parent=1 // pred_check_branch
      %89 = sbr.rel (0) target = $region41
    $region40: #{tpu_custom_call.1} parent=1 // pred_region
      %91 = dma.done [#allocation9], 128
    $region41: #{tpu_custom_call.1} parent=1 // pred_fallthru
      _
    // Predicated region
    $region42: #{tpu_custom_call.1} parent=1 // pred_check
      _
    $region43: #{tpu_custom_call.1} parent=1 // pred_check_branch
      %93 = sbr.rel (0) target = $region45
    $region44: #{tpu_custom_call.1} parent=1 // pred_region
      %95 = dma.done [#allocation9], 128
    $region45: #{tpu_custom_call.1} parent=1 // pred_fallthru
      _
    %v96 = vlaneseq
    %v97 = vand.u32 %v96, 127
    %v98 = vld [vmem:[#allocation8] sm:$0xf]
    %v99 = vld [vmem:[#allocation8 + $0x4] sm:$0xf]
    %v100 = vunpack.c.l.bf16 %v98
    %v101 = vunpack.c.l.bf16 %v99
    %v102 = vld [vmem:[#allocation10] sm:$0xf]
    %v103 = vld [vmem:[#allocation10 + $0x4] sm:$0xf]
    %v104 = vunpack.c.l.bf16 %v102
    %v105 = vunpack.c.l.bf16 %v103
    %v106 = vand.u32 2147483647, %v100
    %v107 = vand.u32 2147483647, %v101
    %v108 = vsub.f32 0.0, %v106
    %v109 = vsub.f32 0.0, %v107
    %v110 = vmul.f32 %v108, 1.442695
    %v111 = vpow.pop %v110
    %v112 = vmul.f32 %v109, 1.442695
    %v113 = vpow.pop %v112
    %v114 = vmax.f32 %v100, 0.0
    %v115 = vmax.f32 %v101, 0.0
    %v116 = vmul.f32 %v100, %v104
    %v117 = vmul.f32 %v101, %v105
    %v118 = vsub.f32 %v114, %v116
    %v119 = vsub.f32 %v115, %v117
    %v120 = vadd.f32 %v111, 1.0
    %v121 = vlog2.pop %v120
    %v122 = vmul.f32 %v121, 0.6931472
    %v123 = vmul.f32 -0.5, %v111
    %v124 = vadd.f32 %v123, 1.0
    %v125 = vmul.f32 %v124, %v111
    %v126 = vand.u32 2147483647, %v111
    %vm127 = vcmp.lt.f32.partialorder %v126, 0.0004427343
    %v128 = vsel %vm127, %v125, %v122
    %v129 = vadd.f32 %v113, 1.0
    %v130 = vlog2.pop %v129
    %v131 = vmul.f32 %v130, 0.6931472
    %v132 = vmul.f32 -0.5, %v113
    %v133 = vadd.f32 %v132, 1.0
    %v134 = vmul.f32 %v133, %v113
    %v135 = vand.u32 2147483647, %v113
    %vm136 = vcmp.lt.f32.partialorder %v135, 0.0004427343
    %v137 = vsel %vm136, %v134, %v131
    %v138 = vadd.f32 %v118, %v128
    %v139 = vadd.f32 %v119, %v137
    %140 = vadd.xlane.f32.xlu0 %v138
    %v141 = vpop.xlane.xlu0 %140
    %142 = vadd.xlane.f32.xlu0 %v139
    %v143 = vpop.xlane.xlu0 %142
    %v144 = vadd.f32 %v141, %v143
    %v145 = vrot.slane %v144, 4
    %v146 = vadd.f32 %v144, %v145
    %v147 = vrot.slane %v146, 2
    %v148 = vadd.f32 %v146, %v147
    %v149 = vrot.slane %v148, 1
    %v150 = vadd.f32 %v148, %v149
    %vm151 = vcmp.ge.f32.partialorder %v100, 0.0
    %vm152 = vcmp.ge.f32.partialorder %v101, 0.0
    %v153 = vsel %vm151, 1.0, %v111
    %v154 = vsel %vm152, 1.0, %v113
    %v155 = vadd.f32 %v111, 1.0
    %v156 = vadd.f32 %v113, 1.0
    %v157 = vrcp.pop %v155
    %v158 = vmul.f32 %v155, %v157
    %v159 = vsub.f32 1.0, %v158
    %v160 = vmul.f32 %v157, %v159
    %v161 = vadd.f32 %v157, %v160
    %vm162 = vweird.f32 %v155
    %vm163 = vweird.f32 %v157
    %vm164 = vmor %vm162, %vm163
    %v165 = vsel %vm164, %v157, %v161
    %v166 = vand.u32 2147483647, %v155
    %vm167 = vcmp.eq.f32.partialorder %v166, 8.507059e+37
    %v168 = vand.u32 %v155, 2147483648
    %v169 = vor.u32 1.1754944e-38, %v168
    %v170 = vsel %vm167, %v169, %v165
    %v171 = vmul.f32 %v153, %v170
    %v172 = vrcp.pop %v156
    %v173 = vmul.f32 %v156, %v172
    %v174 = vsub.f32 1.0, %v173
    %v175 = vmul.f32 %v172, %v174
    %v176 = vadd.f32 %v172, %v175
    %vm177 = vweird.f32 %v156
    %vm178 = vweird.f32 %v172
    %vm179 = vmor %vm177, %vm178
    %v180 = vsel %vm179, %v172, %v176
    %v181 = vand.u32 2147483647, %v156
    %vm182 = vcmp.eq.f32.partialorder %v181, 8.507059e+37
    %v183 = vand.u32 %v156, 2147483648
    %v184 = vor.u32 1.1754944e-38, %v183
    %v185 = vsel %vm182, %v184, %v180
    %v186 = vmul.f32 %v154, %v185
    %v187 = vmul.f32 %v171, %v104
    %v188 = vmul.f32 %v186, %v105
    %189 = vadd.xlane.f32.xlu0 %v187
    %v190 = vpop.xlane.xlu0 %189
    %191 = vadd.xlane.f32.xlu0 %v188
    %v192 = vpop.xlane.xlu0 %191
    %v193 = vmul.f32 %v190, 2.0
    %v194 = vmul.f32 %v192, 2.0
    %195 = vadd.xlane.f32.xlu0 %v171
    %v196 = vpop.xlane.xlu0 %195
    %197 = vadd.xlane.f32.xlu0 %v186
    %v198 = vpop.xlane.xlu0 %197
    %199 = vadd.xlane.f32.xlu0 %v104
    %v200 = vpop.xlane.xlu0 %199
    %201 = vadd.xlane.f32.xlu0 %v105
    %v202 = vpop.xlane.xlu0 %201
    %v203 = vadd.f32 %v196, %v200
    %v204 = vadd.f32 %v198, %v202
    %v205 = vadd.f32 %v193, 1.0
    %v206 = vadd.f32 %v194, 1.0
    %v207 = vadd.f32 %v203, 1.0
    %v208 = vadd.f32 %v204, 1.0
    %v209 = vrcp.pop %v207
    %v210 = vmul.f32 %v207, %v209
    %v211 = vsub.f32 1.0, %v210
    %v212 = vmul.f32 %v209, %v211
    %v213 = vadd.f32 %v209, %v212
    %vm214 = vweird.f32 %v207
    %vm215 = vweird.f32 %v209
    %vm216 = vmor %vm214, %vm215
    %v217 = vsel %vm216, %v209, %v213
    %v218 = vand.u32 2147483647, %v207
    %vm219 = vcmp.eq.f32.partialorder %v218, 8.507059e+37
    %v220 = vand.u32 %v207, 2147483648
    %v221 = vor.u32 1.1754944e-38, %v220
    %v222 = vsel %vm219, %v221, %v217
    %v223 = vmul.f32 %v205, %v222
    %v224 = vrcp.pop %v208
    %v225 = vmul.f32 %v208, %v224
    %v226 = vsub.f32 1.0, %v225
    %v227 = vmul.f32 %v224, %v226
    %v228 = vadd.f32 %v224, %v227
    %vm229 = vweird.f32 %v208
    %vm230 = vweird.f32 %v224
    %vm231 = vmor %vm229, %vm230
    %v232 = vsel %vm231, %v224, %v228
    %v233 = vand.u32 2147483647, %v208
    %vm234 = vcmp.eq.f32.partialorder %v233, 8.507059e+37
    %v235 = vand.u32 %v208, 2147483648
    %v236 = vor.u32 1.1754944e-38, %v235
    %v237 = vsel %vm234, %v236, %v232
    %v238 = vmul.f32 %v206, %v237
    %v239 = vsub.f32 1.0, %v223
    %v240 = vsub.f32 1.0, %v238
    %v241 = vadd.f32 %v239, %v240
    %v242 = vrot.slane %v241, 4
    %v243 = vadd.f32 %v241, %v242
    %v244 = vrot.slane %v243, 2
    %v245 = vadd.f32 %v243, %v244
    %v246 = vrot.slane %v245, 1
    %v247 = vadd.f32 %v245, %v246
    %vm248 = vcmp.eq.s32.totalorder %v97, 0
    %v249 = vsel %vm248, %v150, 0.0
    %vm250 = vcmp.eq.s32.totalorder %v97, 1
    %v251 = vsel %vm250, %v247, 0.0
    %v252 = vadd.f32 %v249, %v251
    %253 = vst [vmem:[#allocation11] sm:$0x1] %v252
    %p254 = scmp.eq.s32.totalorder 0, 0
    // Predicated region
    $region46: #{tpu_custom_call.1} parent=1 // pred_check
      %p255 = pneg %p254
    $region47: #{tpu_custom_call.1} parent=1 // pred_check_branch
      %257 = sbr.rel (%p255) target = $region49
    $region48: #{tpu_custom_call.1} parent=1 // pred_region
      %v258 = vld [vmem:[#allocation2] sm:$0xff]
      %v259 = vrot.slane %v258, 4
      %v260 = vmax.f32 %v258, %v259
      %v261 = vrot.slane %v260, 2
      %v262 = vmax.f32 %v260, %v261
      %v263 = vrot.slane %v262, 1
      %v264 = vmax.f32 %v262, %v263
      %v265 = vsub.f32 %v258, %v264
      %v266 = vmul.f32 %v265, 1.442695
      %v267 = vpow.pop %v266
      %v268 = vrot.slane %v267, 4
      %v269 = vadd.f32 %v267, %v268
      %v270 = vrot.slane %v269, 2
      %v271 = vadd.f32 %v269, %v270
      %v272 = vrot.slane %v271, 1
      %v273 = vadd.f32 %v271, %v272
      %v274 = vlog2.pop %v273
      %v275 = vmul.f32 %v274, 0.6931472
      %v276 = vadd.f32 %v275, %v264
      %v277 = vlaneseq
      %v278 = vshrl.u32 %v277, 7
      %v279 = vld [vmem:[#allocation5] sm:$0x1]
      %v280 = vperm.slane %v279, 0
      %vm281 = vcmp.eq.s32.totalorder %v278, %v280
      %v282 = vsel %vm281, %v258, 0.0
      %v283 = vrot.slane %v282, 4
      %v284 = vadd.f32 %v282, %v283
      %v285 = vrot.slane %v284, 2
      %v286 = vadd.f32 %v284, %v285
      %v287 = vrot.slane %v286, 1
      %v288 = vadd.f32 %v286, %v287
      %v289 = vld [vmem:[%s2] sm:$0x1]
      %v290 = vsub.f32 %v276, %v288
      %v291 = vmul.f32 %v290, %v289
      %v292 = vld [vmem:[#allocation7] sm:$0xff]
      %v293 = vperm.slane %v291, 0
      %v294 = vmul.f32 %v292, %v293
      %295 = vadd.xlane.f32.xlu0 %v294
      %v296 = vpop.xlane.xlu0 %295
      %v298 = vperm.slane %v289, 0
      %v300 = vmul.f32 %v292, %v298
      %301 = vadd.xlane.f32.xlu0 %v300
      %v302 = vpop.xlane.xlu0 %301
      %v303 = vmax.f32 %v302, 1e-12
      %v304 = vrcp.pop %v303
      %v305 = vmul.f32 %v303, %v304
      %v306 = vsub.f32 1.0, %v305
      %v307 = vmul.f32 %v304, %v306
      %v308 = vadd.f32 %v304, %v307
      %vm309 = vweird.f32 %v303
      %vm310 = vweird.f32 %v304
      %vm311 = vmor %vm309, %vm310
      %v312 = vsel %vm311, %v304, %v308
      %v313 = vand.u32 2147483647, %v303
      %vm314 = vcmp.eq.f32.partialorder %v313, 8.507059e+37
      %v315 = vand.u32 %v303, 2147483648
      %v316 = vor.u32 1.1754944e-38, %v315
      %v317 = vsel %vm314, %v316, %v312
      %v318 = vmul.f32 %v296, %v317
      %vm319 = vcmp.lt.s32.totalorder %v278, 2
      %v320 = vsel %vm319, %v318, 0.0
      %v321 = vrot.slane %v320, 4
      %v322 = vadd.f32 %v320, %v321
      %v323 = vrot.slane %v322, 2
      %v324 = vadd.f32 %v322, %v323
      %v325 = vrot.slane %v324, 1
      %v326 = vadd.f32 %v324, %v325
      %v327 = vmul.f32 %v326, 0.5
      %vm328 = vcmp.eq.s32.totalorder %v278, 2
      %v329 = vsel %vm328, %v318, 0.0
      %v330 = vrot.slane %v329, 4
      %v331 = vadd.f32 %v329, %v330
      %v332 = vrot.slane %v331, 2
      %v333 = vadd.f32 %v331, %v332
      %v334 = vrot.slane %v333, 1
      %v335 = vadd.f32 %v333, %v334
      %v336 = vld [vmem:[#allocation11] sm:$0x1]
      %vm337 = vcmp.eq.s32.totalorder %v97, 2
      %v338 = vsel %vm337, %v327, 0.0
      %v339 = vadd.f32 %v336, %v338
      %vm340 = vcmp.eq.s32.totalorder %v97, 3
      %v341 = vsel %vm340, %v335, 0.0
      %v342 = vadd.f32 %v339, %v341
      %343 = vst [vmem:[#allocation11] sm:$0x1] %v342
    $region49: #{tpu_custom_call.1} parent=1 // pred_fallthru
      _
    // Predicated region
    $region50: #{tpu_custom_call.1} parent=1 // pred_check
      _
    $region51: #{tpu_custom_call.1} parent=1 // pred_check_branch
      %345 = sbr.rel (0) target = $region53
    $region52: #{tpu_custom_call.1} parent=1 // pred_region
      %347 = vsyncadd [#allocation4], 0
      %s349 = sshll.u32 [#allocation11], 4
      %s350 = int_to_ptr.vmem [resolvable:$true] %s349
      %s351 = sshll.u32 %s6, 4
      %s352 = int_to_ptr.hbm [resolvable:$true] %s351
      %354 = dma.vmem_to_hbm [thread:$0]  %s350, 16, %s352, [#allocation4]
    $region53: #{tpu_custom_call.1} parent=1 // pred_fallthru
      _
    // Predicated region
    $region54: #{tpu_custom_call.1} parent=1 // pred_check
      _
    $region55: #{tpu_custom_call.1} parent=1 // pred_check_branch
      %356 = sbr.rel (0) target = $region57
    $region56: #{tpu_custom_call.1} parent=1 // pred_region
      %358 = dma.done [#allocation4], 16
    $region57: #{tpu_custom_call.1} parent=1 // pred_fallthru
      _
    %359 = vsyncpa [#allocation3], 1
    %360 = vsyncpa [#allocation6], 1
    %361 = vsyncpa [#allocation9], 1
    %362 = vsyncpa [#allocation4], 1

</llo_original>
